<compile_context>
chip_gen: v5e
topology: v5e:2x2
jax: 0.10.0
libtpu: 0.0.40
codegen_flags: <defaults>
</compile_context>

<pallas_src>
import jax
import jax.numpy as jnp
from jax.experimental import pallas as pl
from jax.experimental.pallas import tpu as pltpu

INPUT_DIM = 784            # 1 x 28 x 28 (module default)
OUTPUT_DIM = 62
LANE = 128
OUT_PAD = ((OUTPUT_DIM + LANE - 1) // LANE) * LANE   # 62 -> 128
MAX_ROW_TILE = 512         # fits easily in VMEM: x-tile 512*784*4 ~ 1.6 MiB


def _round_up(x, m):
    return ((x + m - 1) // m) * m


# --------------------------- Pallas kernel -----------------------------------

def _linear_kernel(x_ref, w_ref, b_ref, o_ref):
    # x: (tm, D), w: (D, OUT_PAD), b: (1, OUT_PAD) -> o: (tm, OUT_PAD)
    acc = jnp.dot(x_ref[...], w_ref[...], preferred_element_type=jnp.float32)
    o_ref[...] = (acc + b_ref[...]).astype(o_ref.dtype)


# --------------------------- wrapper ------------------------------------------

def mclr_forward(params, x):
    """Flatten x to (N, input_dim), apply Linear, return (N, output_dim) logits."""
    N = x.shape[0]
    x2 = x.reshape(N, -1).astype(jnp.float32)            # torch.flatten(x, 1)
    D = x2.shape[1]

    w = params["w"]                                       # (D, OUT_PAD); cols >= 62 are zero
    b = params["b"]                                       # (1, OUT_PAD)

    # Row tile: as large as practical (amortizes per-step overhead) but never
    # bigger than the (padded) batch.  Rows padded so the grid divides evenly.
    tm = min(MAX_ROW_TILE, _round_up(N, 8))
    Np = _round_up(N, tm)
    if Np != N:
        x2 = jnp.pad(x2, ((0, Np - N), (0, 0)))

    out = pl.pallas_call(
        _linear_kernel,
        out_shape=jax.ShapeDtypeStruct((Np, OUT_PAD), jnp.float32),
        grid_spec=pltpu.PrefetchScalarGridSpec(
            num_scalar_prefetch=0,
            grid=(Np // tm,),
            in_specs=[
                pl.BlockSpec((tm, D), lambda i: (i, 0)),        # streamed row tile
                pl.BlockSpec((D, OUT_PAD), lambda i: (0, 0)),   # weight, VMEM-resident
                pl.BlockSpec((1, OUT_PAD), lambda i: (0, 0)),   # bias, VMEM-resident
            ],
            out_specs=pl.BlockSpec((tm, OUT_PAD), lambda i: (i, 0)),
        ),
        compiler_params=pltpu.CompilerParams(
            dimension_semantics=("parallel",),   # shard row tiles across TCs on v7x
        ),
    )(x2, w, b)

    # Slice away row padding and lane padding (62 real classes).
    return out[:N, :OUTPUT_DIM]


# --------------------------- parameter init ----------------------------------

def init_params(key, input_dim=INPUT_DIM, output_dim=OUTPUT_DIM):
    kw, kb = jax.random.split(key)
    # PyTorch nn.Linear default init: U(-1/sqrt(fan_in), 1/sqrt(fan_in)).
    bound = 1.0 / jnp.sqrt(jnp.float32(input_dim))
    w = jax.random.uniform(kw, (input_dim, output_dim), jnp.float32, -bound, bound)
    b = jax.random.uniform(kb, (output_dim,), jnp.float32, -bound, bound)
    # Zero-pad the class dimension to a multiple of 128 for lane-dense stores.
    w_pad = jnp.zeros((input_dim, OUT_PAD), jnp.float32).at[:, :output_dim].set(w)
    b_pad = jnp.zeros((1, OUT_PAD), jnp.float32).at[0, :output_dim].set(b)
    return {"w": w_pad, "b": b_pad}


# --------------------------- main ---------------------------------------------

if __name__ == "__main__":
    key = jax.random.PRNGKey(0)
    key, kx = jax.random.split(key)

    # Small MNIST-like batch consistent with input_dim=784: (N, 1, 28, 28).
    x = jax.random.normal(kx, (4, 1, 28, 28), jnp.float32)
    params = init_params(key)

    fwd = jax.jit(mclr_forward)
    out = jax.block_until_ready(fwd(params, x))

    assert out.shape == (4, OUTPUT_DIM), out.shape

    # Reference check against plain JAX (flatten + x @ W + b).
    x_flat = x.reshape(4, -1)
    ref = x_flat @ params["w"][:, :OUTPUT_DIM] + params["b"][0, :OUTPUT_DIM]
    err = float(jnp.max(jnp.abs(out - ref)))
    assert err < 1e-4, err

    print("KERNEL_OK")
</pallas_src>

<mosaic_0001>
module attributes {stable_mosaic.version = 11 : i64} {
  func.func @_linear_kernel(%arg0: i32, %arg1: memref<8x784xf32, #tpu.memory_space<vmem>>, %arg2: memref<784x128xf32, #tpu.memory_space<vmem>>, %arg3: memref<1x128xf32, #tpu.memory_space<vmem>>, %arg4: memref<8x128xf32, #tpu.memory_space<vmem>>) attributes {dimension_semantics = [#tpu.dimension_semantics<parallel>], iteration_bounds = array<i64: 1>, scalar_prefetch = 0 : i64, scratch_operands = 0 : i64, tpu.core_type = #tpu.core_type<tc>, window_params = [{transform_indices = @transform_0, window_bounds = array<i64: 8, 784>}, {pipeline_mode = #tpu.pipeline_mode<synchronous>, transform_indices = @transform_1, window_bounds = array<i64: 784, 128>}, {pipeline_mode = #tpu.pipeline_mode<synchronous>, transform_indices = @transform_2, window_bounds = array<i64: 1, 128>}, {transform_indices = @transform_3, window_bounds = array<i64: 8, 128>}]} {
    %c0 = arith.constant 0 : index
    %c0_0 = arith.constant 0 : index
    %0 = vector.load %arg1[%c0, %c0_0] : memref<8x784xf32, #tpu.memory_space<vmem>>, vector<8x784xf32>
    %c0_1 = arith.constant 0 : index
    %c0_2 = arith.constant 0 : index
    %1 = vector.load %arg2[%c0_1, %c0_2] : memref<784x128xf32, #tpu.memory_space<vmem>>, vector<784x128xf32>
    %cst = arith.constant dense<0.000000e+00> : vector<8x128xf32>
    %2 = tpu.matmul %0, %1, %cst {dimension_numbers = #tpu.dot_dimension_numbers<[1], [0], [0], [1], [0, 0, 1, 1], [], []>} : vector<8x784xf32>, vector<784x128xf32>, vector<8x128xf32> -> vector<8x128xf32>
    %c0_3 = arith.constant 0 : index
    %c0_4 = arith.constant 0 : index
    %3 = vector.load %arg3[%c0_3, %c0_4] : memref<1x128xf32, #tpu.memory_space<vmem>>, vector<1x128xf32>
    %4 = vector.broadcast %3 : vector<1x128xf32> to vector<8x128xf32>
    %5 = arith.addf %2, %4 : vector<8x128xf32>
    %c0_5 = arith.constant 0 : index
    %c0_6 = arith.constant 0 : index
    %6 = vector.load %arg4[%c0_5, %c0_6] : memref<8x128xf32, #tpu.memory_space<vmem>>, vector<8x128xf32>
    tpu.vector_store %arg4[%c0_5, %c0_6], %5 {strides = array<i32>} : memref<8x128xf32, #tpu.memory_space<vmem>>, vector<8x128xf32>,
    return
  }
  func.func @transform_0(%arg0: i32) -> (i32, i32) {
    %c0_i32 = arith.constant 0 : i32
    %c0_i32_0 = arith.constant 0 : i32
    return %arg0, %c0_i32 : i32, i32
  }
  func.func @transform_1(%arg0: i32) -> (i32, i32) {
    %c0_i32 = arith.constant 0 : i32
    %c0_i32_0 = arith.constant 0 : i32
    %c0_i32_1 = arith.constant 0 : i32
    return %c0_i32, %c0_i32_0 : i32, i32
  }
  func.func @transform_2(%arg0: i32) -> (i32, i32) {
    %c0_i32 = arith.constant 0 : i32
    %c0_i32_0 = arith.constant 0 : i32
    %c0_i32_1 = arith.constant 0 : i32
    return %c0_i32, %c0_i32_0 : i32, i32
  }
  func.func @transform_3(%arg0: i32) -> (i32, i32) {
    %c0_i32 = arith.constant 0 : i32
    %c0_i32_0 = arith.constant 0 : i32
    return %arg0, %c0_i32 : i32, i32
  }
}

</mosaic_0001>

<llo_original>
// kernel: mclr_forward.1
$region0: #{mclr_forward.1}
  #allocation0 [shape = 'u32[]', space=smem, size = 0x4, offset = 0x4, fixed_abs, tag = 'smem constant byte address 0x4 - core index']
  #allocation1 [shape = 'u32[72,128]{1,0:T(1,128)}', space=vmem, size = 0x9000, scoped, tag = 'internal scratch']
  %s0 = inlined_call_operand.vmem [shape: f32[8,784], index: 0, kind: input, shape index: {}]
  %s1 = inlined_call_operand.hbm [shape: f32[784,128], index: 1, kind: input, shape index: {}]
  %s2 = inlined_call_operand.vmem [shape: f32[1,128], index: 2, kind: input, shape index: {}]
  %s3 = inlined_call_operand.vmem [shape: f32[8,128], index: 3, kind: output, shape index: {}]
  %s4 = sld [smem:[#allocation0]]
  $region26: #{mclr_forward.1} parent=0
    _
  %s6 = ssub.s32 1, %s4
  %s7 = scalar_select 0, %s6, %s4
  $region1: #{mclr_forward.1} parent=0
    #allocation2 [shape = 'u8[401408]{0}', space=vmem, size = 0x62000, scoped, tag = 'input window, operand 1, single buffered']
    #allocation3 [shape = 's32[1]{0}', space=sflag, size = 0x4, scoped, tag = 'scoped memory for mclr_forward.1']
    %8 = vsyncpa [#allocation3], 0
    // Predicated region
    $region2: #{mclr_forward.1} parent=1 // pred_check
      _
    $region3: #{mclr_forward.1} parent=1 // pred_check_branch
      %10 = sbr.rel (0) target = $region5
    $region4: #{mclr_forward.1} parent=1 // pred_region
      _
    $region5: #{mclr_forward.1} parent=1 // pred_fallthru
      _
    // Predicated region
    $region6: #{mclr_forward.1} parent=1 // pred_check
      _
    $region7: #{mclr_forward.1} parent=1 // pred_check_branch
      %12 = sbr.rel (0) target = $region9
    $region8: #{mclr_forward.1} parent=1 // pred_region
      %14 = vsyncadd [#allocation3], 0
      %s15 = sshll.u32 %s1, 4
      %s16 = int_to_ptr.hbm [resolvable:$true] %s15
      %s17 = sshll.u32 [#allocation2], 4
      %s18 = int_to_ptr.vmem [resolvable:$true] %s17
      %23 = dma.hbm_to_vmem [thread:$0]  %s16, 12544, %s18, [#allocation3], 128, 128, 8
    $region9: #{mclr_forward.1} parent=1 // pred_fallthru
      _
    // Predicated region
    $region10: #{mclr_forward.1} parent=1 // pred_check
      _
    $region11: #{mclr_forward.1} parent=1 // pred_check_branch
      %25 = sbr.rel (0) target = $region13
    $region12: #{mclr_forward.1} parent=1 // pred_region
      _
    $region13: #{mclr_forward.1} parent=1 // pred_fallthru
      _
    // Predicated region
    $region14: #{mclr_forward.1} parent=1 // pred_check
      _
    $region15: #{mclr_forward.1} parent=1 // pred_check_branch
      %27 = sbr.rel (0) target = $region17
    $region16: #{mclr_forward.1} parent=1 // pred_region
      %29 = dma.done [#allocation3], 12544
    $region17: #{mclr_forward.1} parent=1 // pred_fallthru
      _
    %v30 = vld [vmem:[%s0] sm:$0xff]
    %v31 = vld [vmem:[%s0 + $0x8] sm:$0xff]
    %v32 = vld [vmem:[%s0 + $0x10] sm:$0xff]
    %v33 = vld [vmem:[%s0 + $0x18] sm:$0xff]
    %v34 = vld [vmem:[%s0 + $0x20] sm:$0xff]
    %v35 = vld [vmem:[%s0 + $0x28] sm:$0xff]
    %v36 = vld [vmem:[%s0 + $0x30] sm:$0xff]
    %v37 = vld [vmem:[#allocation2] sm:$0xff]
    %v38 = vld [vmem:[#allocation2 + $0x8] sm:$0xff]
    %v39 = vld [vmem:[#allocation2 + $0x10] sm:$0xff]
    %v40 = vld [vmem:[#allocation2 + $0x18] sm:$0xff]
    %v41 = vld [vmem:[#allocation2 + $0x20] sm:$0xff]
    %v42 = vld [vmem:[#allocation2 + $0x28] sm:$0xff]
    %v43 = vld [vmem:[#allocation2 + $0x30] sm:$0xff]
    %v44 = vld [vmem:[#allocation2 + $0x38] sm:$0xff]
    %v45 = vld [vmem:[#allocation2 + $0x40] sm:$0xff]
    %v46 = vld [vmem:[#allocation2 + $0x48] sm:$0xff]
    %v47 = vld [vmem:[#allocation2 + $0x50] sm:$0xff]
    %v48 = vld [vmem:[#allocation2 + $0x58] sm:$0xff]
    %v49 = vld [vmem:[#allocation2 + $0x60] sm:$0xff]
    %v50 = vld [vmem:[#allocation2 + $0x68] sm:$0xff]
    %v51 = vld [vmem:[#allocation2 + $0x70] sm:$0xff]
    %v52 = vld [vmem:[#allocation2 + $0x78] sm:$0xff]
    %v53 = vld [vmem:[#allocation2 + $0x80] sm:$0xff]
    %v54 = vld [vmem:[#allocation2 + $0x88] sm:$0xff]
    %v55 = vld [vmem:[#allocation2 + $0x90] sm:$0xff]
    %v56 = vld [vmem:[#allocation2 + $0x98] sm:$0xff]
    %v57 = vld [vmem:[#allocation2 + $0xa0] sm:$0xff]
    %v58 = vld [vmem:[#allocation2 + $0xa8] sm:$0xff]
    %v59 = vld [vmem:[#allocation2 + $0xb0] sm:$0xff]
    %v60 = vld [vmem:[#allocation2 + $0xb8] sm:$0xff]
    %v61 = vld [vmem:[#allocation2 + $0xc0] sm:$0xff]
    %v62 = vld [vmem:[#allocation2 + $0xc8] sm:$0xff]
    %v63 = vld [vmem:[#allocation2 + $0xd0] sm:$0xff]
    %v64 = vld [vmem:[#allocation2 + $0xd8] sm:$0xff]
    %v65 = vld [vmem:[#allocation2 + $0xe0] sm:$0xff]
    %v66 = vld [vmem:[#allocation2 + $0xe8] sm:$0xff]
    %v67 = vld [vmem:[#allocation2 + $0xf0] sm:$0xff]
    %v68 = vld [vmem:[#allocation2 + $0xf8] sm:$0xff]
    %v69 = vld [vmem:[#allocation2 + $0x100] sm:$0xff]
    %v70 = vld [vmem:[#allocation2 + $0x108] sm:$0xff]
    %v71 = vld [vmem:[#allocation2 + $0x110] sm:$0xff]
    %v72 = vld [vmem:[#allocation2 + $0x118] sm:$0xff]
    %v73 = vld [vmem:[#allocation2 + $0x120] sm:$0xff]
    %v74 = vld [vmem:[#allocation2 + $0x128] sm:$0xff]
    %v75 = vld [vmem:[#allocation2 + $0x130] sm:$0xff]
    %v76 = vld [vmem:[#allocation2 + $0x138] sm:$0xff]
    %v77 = vld [vmem:[#allocation2 + $0x140] sm:$0xff]
    %v78 = vld [vmem:[#allocation2 + $0x148] sm:$0xff]
    %v79 = vld [vmem:[#allocation2 + $0x150] sm:$0xff]
    %v80 = vld [vmem:[#allocation2 + $0x158] sm:$0xff]
    %v81 = vld [vmem:[#allocation2 + $0x160] sm:$0xff]
    %v82 = vld [vmem:[#allocation2 + $0x168] sm:$0xff]
    %v83 = vld [vmem:[#allocation2 + $0x170] sm:$0xff]
    %v84 = vld [vmem:[#allocation2 + $0x178] sm:$0xff]
    %v85 = vld [vmem:[#allocation2 + $0x180] sm:$0xff]
    %v86 = vld [vmem:[#allocation2 + $0x188] sm:$0xff]
    %v87 = vld [vmem:[#allocation2 + $0x190] sm:$0xff]
    %v88 = vld [vmem:[#allocation2 + $0x198] sm:$0xff]
    %v89 = vld [vmem:[#allocation2 + $0x1a0] sm:$0xff]
    %v90 = vld [vmem:[#allocation2 + $0x1a8] sm:$0xff]
    %v91 = vld [vmem:[#allocation2 + $0x1b0] sm:$0xff]
    %v92 = vld [vmem:[#allocation2 + $0x1b8] sm:$0xff]
    %v93 = vld [vmem:[#allocation2 + $0x1c0] sm:$0xff]
    %v94 = vld [vmem:[#allocation2 + $0x1c8] sm:$0xff]
    %v95 = vld [vmem:[#allocation2 + $0x1d0] sm:$0xff]
    %v96 = vld [vmem:[#allocation2 + $0x1d8] sm:$0xff]
    %v97 = vld [vmem:[#allocation2 + $0x1e0] sm:$0xff]
    %v98 = vld [vmem:[#allocation2 + $0x1e8] sm:$0xff]
    %v99 = vld [vmem:[#allocation2 + $0x1f0] sm:$0xff]
    %v100 = vld [vmem:[#allocation2 + $0x1f8] sm:$0xff]
    %v101 = vld [vmem:[#allocation2 + $0x200] sm:$0xff]
    %v102 = vld [vmem:[#allocation2 + $0x208] sm:$0xff]
    %v103 = vld [vmem:[#allocation2 + $0x210] sm:$0xff]
    %v104 = vld [vmem:[#allocation2 + $0x218] sm:$0xff]
    %v105 = vld [vmem:[#allocation2 + $0x220] sm:$0xff]
    %v106 = vld [vmem:[#allocation2 + $0x228] sm:$0xff]
    %v107 = vld [vmem:[#allocation2 + $0x230] sm:$0xff]
    %v108 = vld [vmem:[#allocation2 + $0x238] sm:$0xff]
    %v109 = vld [vmem:[#allocation2 + $0x240] sm:$0xff]
    %v110 = vld [vmem:[#allocation2 + $0x248] sm:$0xff]
    %v111 = vld [vmem:[#allocation2 + $0x250] sm:$0xff]
    %v112 = vld [vmem:[#allocation2 + $0x258] sm:$0xff]
    %v113 = vld [vmem:[#allocation2 + $0x260] sm:$0xff]
    %v114 = vld [vmem:[#allocation2 + $0x268] sm:$0xff]
    %v115 = vld [vmem:[#allocation2 + $0x270] sm:$0xff]
    %v116 = vld [vmem:[#allocation2 + $0x278] sm:$0xff]
    %v117 = vld [vmem:[#allocation2 + $0x280] sm:$0xff]
    %v118 = vld [vmem:[#allocation2 + $0x288] sm:$0xff]
    %v119 = vld [vmem:[#allocation2 + $0x290] sm:$0xff]
    %v120 = vld [vmem:[#allocation2 + $0x298] sm:$0xff]
    %v121 = vld [vmem:[#allocation2 + $0x2a0] sm:$0xff]
    %v122 = vld [vmem:[#allocation2 + $0x2a8] sm:$0xff]
    %v123 = vld [vmem:[#allocation2 + $0x2b0] sm:$0xff]
    %v124 = vld [vmem:[#allocation2 + $0x2b8] sm:$0xff]
    %v125 = vld [vmem:[#allocation2 + $0x2c0] sm:$0xff]
    %v126 = vld [vmem:[#allocation2 + $0x2c8] sm:$0xff]
    %v127 = vld [vmem:[#allocation2 + $0x2d0] sm:$0xff]
    %v128 = vld [vmem:[#allocation2 + $0x2d8] sm:$0xff]
    %v129 = vld [vmem:[#allocation2 + $0x2e0] sm:$0xff]
    %v130 = vld [vmem:[#allocation2 + $0x2e8] sm:$0xff]
    %v131 = vld [vmem:[#allocation2 + $0x2f0] sm:$0xff]
    %v132 = vld [vmem:[#allocation2 + $0x2f8] sm:$0xff]
    %v133 = vld [vmem:[#allocation2 + $0x300] sm:$0xff]
    %v134 = vld [vmem:[#allocation2 + $0x308] sm:$0xff]
    %v135 = vld [vmem:[%s2] sm:$0x1]
    %v137 = vperm.slane %v135, 0
    %vm139 = vcmask 130048
    %v141 = vsel %vm139, %v36, 0
    %143 = vmatpush.msra.mxu0 %v52
    %144 = vmatpush.msra.mxu0 %v51
    %145 = vmatpush.msra.mxu0 %v50
    %146 = vmatpush.msra.mxu0 %v49
    %147 = vmatpush.msra.mxu0 %v48
    %148 = vmatpush.msra.mxu0 %v47
    %149 = vmatpush.msra.mxu0 %v46
    %150 = vmatpush.msra.mxu0 %v45
    %151 = vmatpush.msra.mxu0 %v44
    %152 = vmatpush.msra.mxu0 %v43
    %153 = vmatpush.msra.mxu0 %v42
    %154 = vmatpush.msra.mxu0 %v41
    %155 = vmatpush.msra.mxu0 %v40
    %156 = vmatpush.msra.mxu0 %v39
    %157 = vmatpush.msra.mxu0 %v38
    %158 = vmatpush.msra.mxu0 %v37
    %159 = vmatmul.f32.gmra.mxu0 %v30
    %v160 = vpop.f32.mrf.mxu0
    %v161 = vadd.f32 %v137, %v160
    %162 = vdwg.mxu0
    %163 = vmatpush.msra.mxu0 %v68
    %164 = vmatpush.msra.mxu0 %v67
    %165 = vmatpush.msra.mxu0 %v66
    %166 = vmatpush.msra.mxu0 %v65
    %167 = vmatpush.msra.mxu0 %v64
    %168 = vmatpush.msra.mxu0 %v63
    %169 = vmatpush.msra.mxu0 %v62
    %170 = vmatpush.msra.mxu0 %v61
    %171 = vmatpush.msra.mxu0 %v60
    %172 = vmatpush.msra.mxu0 %v59
    %173 = vmatpush.msra.mxu0 %v58
    %174 = vmatpush.msra.mxu0 %v57
    %175 = vmatpush.msra.mxu0 %v56
    %176 = vmatpush.msra.mxu0 %v55
    %177 = vmatpush.msra.mxu0 %v54
    %178 = vmatpush.msra.mxu0 %v53
    %179 = vmatmul.f32.gmra.mxu0 %v31
    %v180 = vpop.f32.mrf.mxu0
    %v181 = vadd.f32 %v161, %v180
    %182 = vdwg.mxu0
    %183 = vmatpush.msra.mxu0 %v84
    %184 = vmatpush.msra.mxu0 %v83
    %185 = vmatpush.msra.mxu0 %v82
    %186 = vmatpush.msra.mxu0 %v81
    %187 = vmatpush.msra.mxu0 %v80
    %188 = vmatpush.msra.mxu0 %v79
    %189 = vmatpush.msra.mxu0 %v78
    %190 = vmatpush.msra.mxu0 %v77
    %191 = vmatpush.msra.mxu0 %v76
    %192 = vmatpush.msra.mxu0 %v75
    %193 = vmatpush.msra.mxu0 %v74
    %194 = vmatpush.msra.mxu0 %v73
    %195 = vmatpush.msra.mxu0 %v72
    %196 = vmatpush.msra.mxu0 %v71
    %197 = vmatpush.msra.mxu0 %v70
    %198 = vmatpush.msra.mxu0 %v69
    %199 = vmatmul.f32.gmra.mxu0 %v32
    %v200 = vpop.f32.mrf.mxu0
    %v201 = vadd.f32 %v181, %v200
    %202 = vdwg.mxu0
    %203 = vmatpush.msra.mxu0 %v100
    %204 = vmatpush.msra.mxu0 %v99
    %205 = vmatpush.msra.mxu0 %v98
    %206 = vmatpush.msra.mxu0 %v97
    %207 = vmatpush.msra.mxu0 %v96
    %208 = vmatpush.msra.mxu0 %v95
    %209 = vmatpush.msra.mxu0 %v94
    %210 = vmatpush.msra.mxu0 %v93
    %211 = vmatpush.msra.mxu0 %v92
    %212 = vmatpush.msra.mxu0 %v91
    %213 = vmatpush.msra.mxu0 %v90
    %214 = vmatpush.msra.mxu0 %v89
    %215 = vmatpush.msra.mxu0 %v88
    %216 = vmatpush.msra.mxu0 %v87
    %217 = vmatpush.msra.mxu0 %v86
    %218 = vmatpush.msra.mxu0 %v85
    %219 = vmatmul.f32.gmra.mxu0 %v33
    %v220 = vpop.f32.mrf.mxu0
    %v221 = vadd.f32 %v201, %v220
    %222 = vdwg.mxu0
    %223 = vmatpush.msra.mxu0 %v116
    %224 = vmatpush.msra.mxu0 %v115
    %225 = vmatpush.msra.mxu0 %v114
    %226 = vmatpush.msra.mxu0 %v113
    %227 = vmatpush.msra.mxu0 %v112
    %228 = vmatpush.msra.mxu0 %v111
    %229 = vmatpush.msra.mxu0 %v110
    %230 = vmatpush.msra.mxu0 %v109
    %231 = vmatpush.msra.mxu0 %v108
    %232 = vmatpush.msra.mxu0 %v107
    %233 = vmatpush.msra.mxu0 %v106
    %234 = vmatpush.msra.mxu0 %v105
    %235 = vmatpush.msra.mxu0 %v104
    %236 = vmatpush.msra.mxu0 %v103
    %237 = vmatpush.msra.mxu0 %v102
    %238 = vmatpush.msra.mxu0 %v101
    %239 = vmatmul.f32.gmra.mxu0 %v34
    %v240 = vpop.f32.mrf.mxu0
    %v241 = vadd.f32 %v221, %v240
    %242 = vdwg.mxu0
    %243 = vmatpush.msra.mxu0 %v132
    %244 = vmatpush.msra.mxu0 %v131
    %245 = vmatpush.msra.mxu0 %v130
    %246 = vmatpush.msra.mxu0 %v129
    %247 = vmatpush.msra.mxu0 %v128
    %248 = vmatpush.msra.mxu0 %v127
    %249 = vmatpush.msra.mxu0 %v126
    %250 = vmatpush.msra.mxu0 %v125
    %251 = vmatpush.msra.mxu0 %v124
    %252 = vmatpush.msra.mxu0 %v123
    %253 = vmatpush.msra.mxu0 %v122
    %254 = vmatpush.msra.mxu0 %v121
    %255 = vmatpush.msra.mxu0 %v120
    %256 = vmatpush.msra.mxu0 %v119
    %257 = vmatpush.msra.mxu0 %v118
    %258 = vmatpush.msra.mxu0 %v117
    %259 = vmatmul.f32.gmra.mxu0 %v35
    %v260 = vpop.f32.mrf.mxu0
    %v261 = vadd.f32 %v241, %v260
    %262 = vdwg.mxu0
    %263 = vmatpush.msra.mxu0 0.0
    %264 = vmatpush.msra.mxu0 0.0
    %265 = vmatpush.msra.mxu0 0.0
    %266 = vmatpush.msra.mxu0 0.0
    %267 = vmatpush.msra.mxu0 0.0
    %268 = vmatpush.msra.mxu0 0.0
    %269 = vmatpush.msra.mxu0 0.0
    %270 = vmatpush.msra.mxu0 0.0
    %271 = vmatpush.msra.mxu0 0.0
    %272 = vmatpush.msra.mxu0 0.0
    %273 = vmatpush.msra.mxu0 0.0
    %274 = vmatpush.msra.mxu0 0.0
    %275 = vmatpush.msra.mxu0 0.0
    %276 = vmatpush.msra.mxu0 0.0
    %277 = vmatpush.msra.mxu0 %v134
    %278 = vmatpush.msra.mxu0 %v133
    %279 = vmatmul.f32.gmra.mxu0 %v141
    %v280 = vpop.f32.mrf.mxu0
    %v281 = vadd.f32 %v261, %v280
    %282 = vdwg.mxu0
    %283 = vst [vmem:[%s3] sm:$0xff] %v281
    // Predicated region
    $region18: #{mclr_forward.1} parent=1 // pred_check
      _
    $region19: #{mclr_forward.1} parent=1 // pred_check_branch
      %285 = sbr.rel (0) target = $region21
    $region20: #{mclr_forward.1} parent=1 // pred_region
      _
    $region21: #{mclr_forward.1} parent=1 // pred_fallthru
      _
    // Predicated region
    $region22: #{mclr_forward.1} parent=1 // pred_check
      _
    $region23: #{mclr_forward.1} parent=1 // pred_check_branch
      %287 = sbr.rel (0) target = $region25
    $region24: #{mclr_forward.1} parent=1 // pred_region
      _
    $region25: #{mclr_forward.1} parent=1 // pred_fallthru
      _
    %288 = vsyncpa [#allocation3], 1

</llo_original>
